<compile_context>
chip_gen: v7x
topology: tpu7x:2x2x1
jax: 0.10.0
libtpu: 0.0.40
codegen_flags: <defaults>
</compile_context>

<pallas_src>
import math

import jax
import jax.numpy as jnp
from jax.experimental import pallas as pl
from jax.experimental.pallas import tpu as pltpu


_LANE = 128
_SUBLANE = 8
_MIN_PARALLEL_TM = 256
_TM_CANDIDATES = (4096, 2048, 1024, 512, 256, 128, 64, 32, 16, 8)
_TK_CANDIDATES = (4096, 2048, 1024, 512, 256, 128)


def _round_up(a, b):
    return ((a + b - 1) // b) * b


def _vmem_budgets():
    """Generation-aware scoped-VMEM limit and tile budget (bytes)."""
    try:
        cap = int(pltpu.get_tpu_info().vmem_capacity_bytes)
    except Exception:
        cap = 64 * 1024 * 1024          # v7x per-core VMEM: safe lower bound
    cap = max(cap, 32 * 1024 * 1024)
    vmem_limit = min((cap * 3) // 4, 100 * 1024 * 1024)   # v5e/v6e ~96 MiB, v7x ~48 MiB
    tile_budget = (vmem_limit * 4) // 5                    # headroom under scoped limit
    return vmem_limit, tile_budget


def _select_tiling(m, d_model, n_pad, x_bytes, w_bytes, b_bytes, o_bytes, tile_budget):
    """Pick (tm, tk). tk == d_model means W fully resident (no K grid axis)."""
    m_rounded = max(_SUBLANE, _round_up(m, _SUBLANE))

    # Path 1: W (single-buffered via pl.Buffered(1)) + bias resident; tile only M.
    resident = d_model * n_pad * w_bytes + n_pad * b_bytes
    for tm in _TM_CANDIDATES:
        if tm > m_rounded:
            continue
        tiles = 2 * tm * d_model * x_bytes + 2 * tm * n_pad * o_bytes
        if resident + tiles <= tile_budget:
            return tm, d_model

    # Path 2: K-tiled fallback for very large d_model (stream W, f32 accumulator).
    if d_model % _LANE == 0:
        for tm in _TM_CANDIDATES:
            if tm > m_rounded:
                continue
            for tk in _TK_CANDIDATES:
                if tk >= d_model or d_model % tk != 0:
                    continue
                need = (2 * tm * tk * x_bytes        # x tiles (double-buffered)
                        + 2 * tk * n_pad * w_bytes   # W tiles (double-buffered)
                        + n_pad * b_bytes            # bias (single-buffered)
                        + 2 * tm * n_pad * o_bytes   # output tile
                        + tm * n_pad * 4)            # f32 accumulator scratch
                if need <= tile_budget:
                    return tm, tk

    # Last resort: smallest M tile, resident W; let the compiler try.
    return _SUBLANE, d_model


def _make_kernel(has_bias, tiled_k, mxu_dtype):
    def _mm(x_ref, w_ref):
        x = x_ref[...]
        w = w_ref[...]
        if mxu_dtype is not None:
            x = x.astype(mxu_dtype)
            w = w.astype(mxu_dtype)
        return jnp.dot(x, w, preferred_element_type=jnp.float32)

    if not tiled_k:
        if has_bias:
            def kernel(x_ref, w_ref, b_ref, o_ref):
                acc = _mm(x_ref, w_ref) + b_ref[...].astype(jnp.float32)
                o_ref[...] = acc.astype(o_ref.dtype)
        else:
            def kernel(x_ref, w_ref, o_ref):
                o_ref[...] = _mm(x_ref, w_ref).astype(o_ref.dtype)
        return kernel

    if has_bias:
        def kernel(x_ref, w_ref, b_ref, o_ref, acc_ref):
            k = pl.program_id(1)

            @pl.when(k == 0)
            def _():
                acc_ref[...] = jnp.zeros_like(acc_ref)

            acc_ref[...] += _mm(x_ref, w_ref)

            @pl.when(k == pl.num_programs(1) - 1)
            def _():
                o_ref[...] = (acc_ref[...]
                              + b_ref[...].astype(jnp.float32)).astype(o_ref.dtype)
    else:
        def kernel(x_ref, w_ref, o_ref, acc_ref):
            k = pl.program_id(1)

            @pl.when(k == 0)
            def _():
                acc_ref[...] = jnp.zeros_like(acc_ref)

            acc_ref[...] += _mm(x_ref, w_ref)

            @pl.when(k == pl.num_programs(1) - 1)
            def _():
                o_ref[...] = acc_ref[...].astype(o_ref.dtype)
    return kernel


def prepare_linear_probe_params(weight, bias=None):
    """Transpose + lane-pad nn.Linear params once; cache/reuse across forward calls."""
    num_classes, d_model = weight.shape
    n_pad = _round_up(num_classes, _LANE)
    w_t = (jnp.zeros((d_model, n_pad), dtype=weight.dtype)
           .at[:, :num_classes].set(weight.T))
    b2d = None
    if bias is not None:
        b2d = (jnp.zeros((1, n_pad), dtype=bias.dtype)
               .at[:, :num_classes].set(bias))
    return {"w_t": w_t, "bias": b2d, "num_classes": num_classes, "d_model": d_model}


def linear_probe_apply(x, params, *, return_padded=False, mxu_dtype=None):
    """y = x @ W.T + b (nn.Linear semantics) from pre-padded params.

    return_padded=True returns the (..., n_pad) slab (extra columns are exact
    zeros), skipping the post-call slice's extra HBM pass.
    """
    w_t = params["w_t"]
    b2d = params["bias"]
    num_classes = params["num_classes"]
    d_model = params["d_model"]
    has_bias = b2d is not None

    if x.shape[-1] != d_model:
        raise ValueError(f"expected last dim {d_model}, got {x.shape[-1]}")

    lead_shape = x.shape[:-1]
    m = int(math.prod(lead_shape)) if lead_shape else 1
    n_pad = w_t.shape[1]
    x2d = x.reshape(m, d_model)

    x_bytes = jnp.dtype(x.dtype).itemsize
    o_bytes = x_bytes
    w_bytes = jnp.dtype(w_t.dtype).itemsize
    b_bytes = jnp.dtype(b2d.dtype).itemsize if has_bias else 0

    vmem_limit, tile_budget = _vmem_budgets()
    tm, tk = _select_tiling(m, d_model, n_pad, x_bytes, w_bytes, b_bytes,
                            o_bytes, tile_budget)

    # Megacore: if a single tile covers all rows, split M so both v7x TCs work
    # (only when each tile stays >= 256 rows; costs one ~0.35us grid step).
    if pl.cdiv(m, tm) == 1 and m >= 2 * _MIN_PARALLEL_TM:
        tm = _round_up(pl.cdiv(m, 2), _SUBLANE)

    grid_m = pl.cdiv(m, tm)
    grid_k = pl.cdiv(d_model, tk)
    tiled_k = grid_k > 1

    kernel = _make_kernel(has_bias, tiled_k, mxu_dtype)

    cost = pl.CostEstimate(
        flops=2 * m * d_model * n_pad,
        transcendentals=0,
        bytes_accessed=(m * d_model * x_bytes
                        + grid_m * d_model * n_pad * w_bytes
                        + n_pad * b_bytes
                        + m * n_pad * o_bytes),
    )

    def _call(single_buffer_resident):
        resident_kw = {}
        if single_buffer_resident:
            # Constant-index blocks (W, bias) do not need a double buffer.
            resident_kw = {"pipeline_mode": pl.Buffered(1)}

        if not tiled_k:
            grid = (grid_m,)
            in_specs = [
                pl.BlockSpec((tm, d_model), lambda i: (i, 0)),                    # x tile
                pl.BlockSpec((d_model, n_pad), lambda i: (0, 0), **resident_kw),  # W resident
            ]
            if has_bias:
                in_specs.append(
                    pl.BlockSpec((1, n_pad), lambda i: (0, 0), **resident_kw))    # bias
            out_spec = pl.BlockSpec((tm, n_pad), lambda i: (i, 0))
            scratch = []
            semantics = ("parallel",)
        else:
            grid = (grid_m, grid_k)
            in_specs = [
                pl.BlockSpec((tm, tk), lambda i, k: (i, k)),        # x tile
                pl.BlockSpec((tk, n_pad), lambda i, k: (k, 0)),     # W tile (streamed)
            ]
            if has_bias:
                in_specs.append(
                    pl.BlockSpec((1, n_pad), lambda i, k: (0, 0), **resident_kw))
            out_spec = pl.BlockSpec((tm, n_pad), lambda i, k: (i, 0))
            scratch = [pltpu.VMEM((tm, n_pad), jnp.float32)]
            semantics = ("parallel", "arbitrary")

        operands = (x2d, w_t) + ((b2d,) if has_bias else ())
        return pl.pallas_call(
            kernel,
            out_shape=jax.ShapeDtypeStruct((m, n_pad), x.dtype),
            grid_spec=pltpu.PrefetchScalarGridSpec(
                num_scalar_prefetch=0,
                grid=grid,
                in_specs=in_specs,
                out_specs=out_spec,
                scratch_shapes=scratch,
            ),
            compiler_params=pltpu.CompilerParams(
                dimension_semantics=semantics,
                vmem_limit_bytes=vmem_limit,
            ),
            cost_estimate=cost,
        )(*operands)

    try:
        out = _call(True)
    except Exception:
        # Fallback for jax versions without BlockSpec(pipeline_mode=pl.Buffered(1)).
        out = _call(False)

    if return_padded:
        return out.reshape(*lead_shape, n_pad)
    return out[:, :num_classes].reshape(*lead_shape, num_classes)


def linear_probe_forward(x, weight, bias=None, **kwargs):
    """Convenience one-shot wrapper: y = x @ weight.T + bias (torch nn.Linear layout)."""
    return linear_probe_apply(x, prepare_linear_probe_params(weight, bias), **kwargs)


def init_linear_probe_params(key, d_model, num_classes, dtype=jnp.float32):
    """Deterministic init mimicking nn.Linear default (uniform +/- 1/sqrt(d_model))."""
    k_w, k_b = jax.random.split(key)
    bound = 1.0 / math.sqrt(d_model)
    weight = jax.random.uniform(
        k_w, (num_classes, d_model), dtype=dtype, minval=-bound, maxval=bound)
    bias = jax.random.uniform(
        k_b, (num_classes,), dtype=dtype, minval=-bound, maxval=bound)
    return weight, bias


if __name__ == "__main__":
    key = jax.random.PRNGKey(0)
    k_x, k_p, k_x2 = jax.random.split(key, 3)

    batch, seq, d_model, num_classes = 2, 8, 32, 10

    x = jax.random.normal(k_x, (batch, seq, d_model), dtype=jnp.float32)
    weight, bias = init_linear_probe_params(k_p, d_model, num_classes)

    # One-shot path (bias enabled), matches nn.Linear.
    y = linear_probe_forward(x, weight, bias)
    jax.block_until_ready(y)
    y_ref = x @ weight.T + bias
    assert y.shape == (batch, seq, num_classes)
    assert jnp.allclose(y, y_ref, atol=1e-5, rtol=1e-5)

    # Cached-params path, no bias, multi-tile M grid (exercises grid_m >= 2).
    x2 = jax.random.normal(k_x2, (4, 256, d_model), dtype=jnp.float32)
    params = prepare_linear_probe_params(weight, bias=None)
    y2 = linear_probe_apply(x2, params)
    jax.block_until_ready(y2)
    y2_ref = x2 @ weight.T
    assert y2.shape == (4, 256, num_classes)
    assert jnp.allclose(y2, y2_ref, atol=1e-5, rtol=1e-5)

    print("KERNEL_OK")
</pallas_src>

<mosaic_0001>
module attributes {stable_mosaic.version = 11 : i64} {
  func.func @kernel(%arg0: i32, %arg1: memref<16x32xf32, #tpu.memory_space<vmem>>, %arg2: memref<32x128xf32, #tpu.memory_space<vmem>>, %arg3: memref<1x128xf32, #tpu.memory_space<vmem>>, %arg4: memref<16x128xf32, #tpu.memory_space<vmem>>) attributes {dimension_semantics = [#tpu.dimension_semantics<parallel>], iteration_bounds = array<i64: 1>, scalar_prefetch = 0 : i64, scratch_operands = 0 : i64, tpu.core_type = #tpu.core_type<tc>, window_params = [{transform_indices = @transform_0, window_bounds = array<i64: 16, 32>}, {pipeline_mode = #tpu.pipeline_mode<synchronous>, transform_indices = @transform_1, window_bounds = array<i64: 32, 128>}, {pipeline_mode = #tpu.pipeline_mode<synchronous>, transform_indices = @transform_2, window_bounds = array<i64: 1, 128>}, {transform_indices = @transform_3, window_bounds = array<i64: 16, 128>}]} {
    %c0 = arith.constant 0 : index
    %c0_0 = arith.constant 0 : index
    %0 = vector.load %arg1[%c0, %c0_0] : memref<16x32xf32, #tpu.memory_space<vmem>>, vector<16x32xf32>
    %c0_1 = arith.constant 0 : index
    %c0_2 = arith.constant 0 : index
    %1 = vector.load %arg2[%c0_1, %c0_2] : memref<32x128xf32, #tpu.memory_space<vmem>>, vector<32x128xf32>
    %cst = arith.constant dense<0.000000e+00> : vector<16x128xf32>
    %2 = tpu.matmul %0, %1, %cst {dimension_numbers = #tpu.dot_dimension_numbers<[1], [0], [0], [1], [0, 0, 1, 1], [], []>} : vector<16x32xf32>, vector<32x128xf32>, vector<16x128xf32> -> vector<16x128xf32>
    %c0_3 = arith.constant 0 : index
    %c0_4 = arith.constant 0 : index
    %3 = vector.load %arg3[%c0_3, %c0_4] : memref<1x128xf32, #tpu.memory_space<vmem>>, vector<1x128xf32>
    %4 = vector.broadcast %3 : vector<1x128xf32> to vector<16x128xf32>
    %5 = arith.addf %2, %4 : vector<16x128xf32>
    %c0_5 = arith.constant 0 : index
    %c0_6 = arith.constant 0 : index
    %6 = vector.load %arg4[%c0_5, %c0_6] : memref<16x128xf32, #tpu.memory_space<vmem>>, vector<16x128xf32>
    tpu.vector_store %arg4[%c0_5, %c0_6], %5 {strides = array<i32>} : memref<16x128xf32, #tpu.memory_space<vmem>>, vector<16x128xf32>,
    return
  }
  func.func @transform_0(%arg0: i32) -> (i32, i32) {
    %c0_i32 = arith.constant 0 : i32
    %c0_i32_0 = arith.constant 0 : i32
    return %arg0, %c0_i32 : i32, i32
  }
  func.func @transform_1(%arg0: i32) -> (i32, i32) {
    %c0_i32 = arith.constant 0 : i32
    %c0_i32_0 = arith.constant 0 : i32
    %c0_i32_1 = arith.constant 0 : i32
    return %c0_i32, %c0_i32_0 : i32, i32
  }
  func.func @transform_2(%arg0: i32) -> (i32, i32) {
    %c0_i32 = arith.constant 0 : i32
    %c0_i32_0 = arith.constant 0 : i32
    %c0_i32_1 = arith.constant 0 : i32
    return %c0_i32, %c0_i32_0 : i32, i32
  }
  func.func @transform_3(%arg0: i32) -> (i32, i32) {
    %c0_i32 = arith.constant 0 : i32
    %c0_i32_0 = arith.constant 0 : i32
    return %arg0, %c0_i32 : i32, i32
  }
}

module attributes {stable_mosaic.version = 11 : i64} {
  func.func @kernel(%arg0: i32, %arg1: memref<16x32xf32, #tpu.memory_space<vmem>>, %arg2: memref<32x128xf32, #tpu.memory_space<vmem>>, %arg3: memref<1x128xf32, #tpu.memory_space<vmem>>, %arg4: memref<16x128xf32, #tpu.memory_space<vmem>>) attributes {dimension_semantics = [#tpu.dimension_semantics<parallel>], iteration_bounds = array<i64: 1>, scalar_prefetch = 0 : i64, scratch_operands = 0 : i64, tpu.core_type = #tpu.core_type<tc>, window_params = [{transform_indices = @transform_0, window_bounds = array<i64: 16, 32>}, {pipeline_mode = #tpu.pipeline_mode<synchronous>, transform_indices = @transform_1, window_bounds = array<i64: 32, 128>}, {pipeline_mode = #tpu.pipeline_mode<synchronous>, transform_indices = @transform_2, window_bounds = array<i64: 1, 128>}, {transform_indices = @transform_3, window_bounds = array<i64: 16, 128>}]} {
    %c0 = arith.constant 0 : index
    %c0_0 = arith.constant 0 : index
    %0 = vector.load %arg1[%c0, %c0_0] : memref<16x32xf32, #tpu.memory_space<vmem>>, vector<16x32xf32>
    %c0_1 = arith.constant 0 : index
    %c0_2 = arith.constant 0 : index
    %1 = vector.load %arg2[%c0_1, %c0_2] : memref<32x128xf32, #tpu.memory_space<vmem>>, vector<32x128xf32>
    %cst = arith.constant dense<0.000000e+00> : vector<16x128xf32>
    %2 = tpu.matmul %0, %1, %cst {dimension_numbers = #tpu.dot_dimension_numbers<[1], [0], [0], [1], [0, 0, 1, 1], [], []>} : vector<16x32xf32>, vector<32x128xf32>, vector<16x128xf32> -> vector<16x128xf32>
    %c0_3 = arith.constant 0 : index
    %c0_4 = arith.constant 0 : index
    %3 = vector.load %arg3[%c0_3, %c0_4] : memref<1x128xf32, #tpu.memory_space<vmem>>, vector<1x128xf32>
    %4 = vector.broadcast %3 : vector<1x128xf32> to vector<16x128xf32>
    %5 = arith.addf %2, %4 : vector<16x128xf32>
    %c0_5 = arith.constant 0 : index
    %c0_6 = arith.constant 0 : index
    %6 = vector.load %arg4[%c0_5, %c0_6] : memref<16x128xf32, #tpu.memory_space<vmem>>, vector<16x128xf32>
    tpu.vector_store %arg4[%c0_5, %c0_6], %5 {strides = array<i32>} : memref<16x128xf32, #tpu.memory_space<vmem>>, vector<16x128xf32>,
    return
  }
  func.func @transform_0(%arg0: i32) -> (i32, i32) {
    %c0_i32 = arith.constant 0 : i32
    %c0_i32_0 = arith.constant 0 : i32
    return %arg0, %c0_i32 : i32, i32
  }
  func.func @transform_1(%arg0: i32) -> (i32, i32) {
    %c0_i32 = arith.constant 0 : i32
    %c0_i32_0 = arith.constant 0 : i32
    %c0_i32_1 = arith.constant 0 : i32
    return %c0_i32, %c0_i32_0 : i32, i32
  }
  func.func @transform_2(%arg0: i32) -> (i32, i32) {
    %c0_i32 = arith.constant 0 : i32
    %c0_i32_0 = arith.constant 0 : i32
    %c0_i32_1 = arith.constant 0 : i32
    return %c0_i32, %c0_i32_0 : i32, i32
  }
  func.func @transform_3(%arg0: i32) -> (i32, i32) {
    %c0_i32 = arith.constant 0 : i32
    %c0_i32_0 = arith.constant 0 : i32
    return %arg0, %c0_i32 : i32, i32
  }
}

</mosaic_0001>

<llo_original>
// kernel: tpu_custom_call.1
$region0: #{tpu_custom_call.1}
  #allocation0 [shape = 'u32[]', space=smem, size = 0x4, offset = 0x4, fixed_abs, tag = 'smem constant byte address 0x4 - core index']
  #allocation1 [shape = 'u32[144,128]{1,0:T(1,128)}', space=vmem, size = 0x12000, scoped, tag = 'internal scratch']
  %s0 = inlined_call_operand.hbm [shape: f32[16,32], index: 0, kind: input, shape index: {}]
  %s1 = inlined_call_operand.hbm [shape: f32[32,128], index: 1, kind: input, shape index: {}]
  %s2 = inlined_call_operand.vmem [shape: f32[1,128], index: 2, kind: input, shape index: {}]
  %s3 = inlined_call_operand.hbm [shape: f32[16,128], index: 3, kind: output, shape index: {}]
  %s4 = sld [smem:[#allocation0]]
  $region30: #{tpu_custom_call.1} parent=0
    _
  %s6 = ssub.s32 1, %s4
  %s7 = scalar_select 0, %s6, %s4
  $region1: #{tpu_custom_call.1} parent=0
    #allocation2 [shape = 'u8[8192]{0}', space=vmem, size = 0x2000, scoped, tag = 'input window, operand 0, single buffered']
    #allocation3 [shape = 's32[1]{0}', space=sflag, size = 0x4, scoped, tag = 'scoped memory for tpu_custom_call.1']
    #allocation4 [shape = 's32[1]{0}', space=sflag, size = 0x4, scoped, tag = 'scoped memory for tpu_custom_call.1']
    #allocation5 [shape = 'u8[16384]{0}', space=vmem, size = 0x4000, scoped, tag = 'input window, operand 1, single buffered']
    #allocation6 [shape = 's32[1]{0}', space=sflag, size = 0x4, scoped, tag = 'scoped memory for tpu_custom_call.1']
    #allocation7 [shape = 'u8[8192]{0}', space=vmem, size = 0x2000, scoped, tag = 'output window, operand 0, single buffered']
    %8 = vsyncpa [#allocation3], 0
    %9 = vsyncpa [#allocation6], 0
    %10 = vsyncpa [#allocation4], 0
    // Predicated region
    $region2: #{tpu_custom_call.1} parent=1 // pred_check
      _
    $region3: #{tpu_custom_call.1} parent=1 // pred_check_branch
      %12 = sbr.rel (0) target = $region5
    $region4: #{tpu_custom_call.1} parent=1 // pred_region
      %s14 = ssub.s32 256, 256
      %15 = vsyncadd [#allocation3], %s14
      %s16 = sshll.u32 [#allocation2], 4
      %s17 = int_to_ptr.vmem [resolvable:$true] %s16
      %22 = dma.hbm_to_vmem [thread:$0]  %s0, 256, %s17, [#allocation3], 128, 128, 8
    $region5: #{tpu_custom_call.1} parent=1 // pred_fallthru
      _
    // Predicated region
    $region6: #{tpu_custom_call.1} parent=1 // pred_check
      _
    $region7: #{tpu_custom_call.1} parent=1 // pred_check_branch
      %24 = sbr.rel (0) target = $region9
    $region8: #{tpu_custom_call.1} parent=1 // pred_region
      %s26 = ssub.s32 512, 512
      %27 = vsyncadd [#allocation6], %s26
      %s28 = sshll.u32 [#allocation5], 4
      %s29 = int_to_ptr.vmem [resolvable:$true] %s28
      %34 = dma.hbm_to_vmem [thread:$0]  %s1, 512, %s29, [#allocation6], 128, 128, 8
    $region9: #{tpu_custom_call.1} parent=1 // pred_fallthru
      _
    // Predicated region
    $region10: #{tpu_custom_call.1} parent=1 // pred_check
      _
    $region11: #{tpu_custom_call.1} parent=1 // pred_check_branch
      %36 = sbr.rel (0) target = $region13
    $region12: #{tpu_custom_call.1} parent=1 // pred_region
      _
    $region13: #{tpu_custom_call.1} parent=1 // pred_fallthru
      _
    // Predicated region
    $region14: #{tpu_custom_call.1} parent=1 // pred_check
      _
    $region15: #{tpu_custom_call.1} parent=1 // pred_check_branch
      %38 = sbr.rel (0) target = $region17
    $region16: #{tpu_custom_call.1} parent=1 // pred_region
      %39 = dma.done [#allocation3], 256
    $region17: #{tpu_custom_call.1} parent=1 // pred_fallthru
      _
    // Predicated region
    $region18: #{tpu_custom_call.1} parent=1 // pred_check
      _
    $region19: #{tpu_custom_call.1} parent=1 // pred_check_branch
      %41 = sbr.rel (0) target = $region21
    $region20: #{tpu_custom_call.1} parent=1 // pred_region
      %42 = dma.done [#allocation6], 512
    $region21: #{tpu_custom_call.1} parent=1 // pred_fallthru
      _
    %v43 = vld [vmem:[#allocation2] sm:$0xff]
    %v44 = vld [vmem:[#allocation2 + $0x8] sm:$0xff]
    %v45 = vld [vmem:[#allocation5] sm:$0xff]
    %v46 = vld [vmem:[#allocation5 + $0x8] sm:$0xff]
    %v47 = vld [vmem:[#allocation5 + $0x10] sm:$0xff]
    %v48 = vld [vmem:[#allocation5 + $0x18] sm:$0xff]
    %v49 = vld [vmem:[%s2] sm:$0x1]
    %v51 = vlaneseq
    %v52 = vshrl.u32 %v51, 7
    %v53 = vsub.s32 0, %v52
    %v54 = vrot.slane %v49, %v53
    %vm56 = vcmask 261120
    %v58 = vsel %vm56, %v43, 0
    %v61 = vsel %vm56, %v44, 0
    %63 = vmatprep.subr.mxu0 0.0
    %64 = vmatpush1.msra.mxu0 %v45
    %65 = vmatprep.subr.mxu0 0.0
    %66 = vmatpush1.msra.mxu0 %v46
    %67 = vmatprep.subr.mxu0 0.0
    %68 = vmatpush1.msra.mxu0 %v47
    %69 = vmatprep.subr.mxu0 0.0
    %70 = vmatpush1.msra.mxu0 %v48
    %71 = vmatprep.subr.mxu0 0.0
    %72 = vmatpush1.msra.mxu0 0.0
    %73 = vmatprep.subr.mxu0 0.0
    %74 = vmatpush1.msra.mxu0 0.0
    %75 = vmatprep.subr.mxu0 0.0
    %76 = vmatpush1.msra.mxu0 0.0
    %77 = vmatprep.subr.mxu0 0.0
    %78 = vmatpush1.msra.mxu0 0.0
    %79 = vmatprep.subr.mxu0 0.0
    %80 = vmatpush1.msra.mxu0 0.0
    %81 = vmatprep.subr.mxu0 0.0
    %82 = vmatpush1.msra.mxu0 0.0
    %83 = vmatprep.subr.mxu0 0.0
    %84 = vmatpush1.msra.mxu0 0.0
    %85 = vmatprep.subr.mxu0 0.0
    %86 = vmatpush1.msra.mxu0 0.0
    %87 = vmatprep.subr.mxu0 0.0
    %88 = vmatpush1.msra.mxu0 0.0
    %89 = vmatprep.subr.mxu0 0.0
    %90 = vmatpush1.msra.mxu0 0.0
    %91 = vmatprep.subr.mxu0 0.0
    %92 = vmatpush1.msra.mxu0 0.0
    %93 = vmatprep.subr.mxu0 0.0
    %94 = vmatpush1.msra.mxu0 0.0
    %95 = vmatprep.subr.mxu0 0.0
    %96 = vmatpush1.msra.mxu0 0.0
    %97 = vmatprep.subr.mxu0 0.0
    %98 = vmatpush1.msra.mxu0 0.0
    %99 = vmatprep.subr.mxu0 0.0
    %100 = vmatpush1.msra.mxu0 0.0
    %101 = vmatprep.subr.mxu0 0.0
    %102 = vmatpush1.msra.mxu0 0.0
    %103 = vmatprep.subr.mxu0 0.0
    %104 = vmatpush1.msra.mxu0 0.0
    %105 = vmatprep.subr.mxu0 0.0
    %106 = vmatpush1.msra.mxu0 0.0
    %107 = vmatprep.subr.mxu0 0.0
    %108 = vmatpush1.msra.mxu0 0.0
    %109 = vmatprep.subr.mxu0 0.0
    %110 = vmatpush1.msra.mxu0 0.0
    %111 = vmatprep.subr.mxu0 0.0
    %112 = vmatpush1.msra.mxu0 0.0
    %113 = vmatprep.subr.mxu0 0.0
    %114 = vmatpush1.msra.mxu0 0.0
    %115 = vmatprep.subr.mxu0 0.0
    %116 = vmatpush1.msra.mxu0 0.0
    %117 = vmatprep.subr.mxu0 0.0
    %118 = vmatpush1.msra.mxu0 0.0
    %119 = vmatprep.subr.mxu0 0.0
    %120 = vmatpush1.msra.mxu0 0.0
    %121 = vmatprep.subr.mxu0 0.0
    %122 = vmatpush1.msra.mxu0 0.0
    %123 = vmatprep.subr.mxu0 0.0
    %124 = vmatpush1.msra.mxu0 0.0
    %125 = vmatprep.subr.mxu0 0.0
    %126 = vmatpush1.msra.mxu0 0.0
    %127 = vmatprep.mubr.f32.mxu0 0.0
    %128 = vmatmul.mubr.f32.gmra.mrb[0].mxu0 %v58
    %v129 = vpop.f32.mrb[0].mxu0
    %v130 = vadd.f32 %v54, %v129
    %v131 = vpop.f32.mrb[0].mxu0
    %132 = vmatprep.mubr.f32.mxu0 0.0
    %133 = vmatmul.mubr.f32.gmra.mrb[0].mxu0 %v61
    %v134 = vpop.f32.mrb[0].mxu0
    %v135 = vadd.f32 %v54, %v134
    %v136 = vpop.f32.mrb[0].mxu0
    %137 = vdwg.mxu0
    %138 = vst [vmem:[#allocation7] sm:$0xff] %v130
    %139 = vst [vmem:[#allocation7 + $0x8] sm:$0xff] %v135
    // Predicated region
    $region22: #{tpu_custom_call.1} parent=1 // pred_check
      _
    $region23: #{tpu_custom_call.1} parent=1 // pred_check_branch
      %141 = sbr.rel (0) target = $region25
    $region24: #{tpu_custom_call.1} parent=1 // pred_region
      %s143 = ssub.s32 256, 256
      %144 = vsyncadd [#allocation4], %s143
      %s145 = sshll.u32 [#allocation7], 4
      %s146 = int_to_ptr.vmem [resolvable:$true] %s145
      %151 = dma.vmem_to_hbm [thread:$0]  %s146, 256, %s3, [#allocation4], 128, 128, 8
    $region25: #{tpu_custom_call.1} parent=1 // pred_fallthru
      _
    // Predicated region
    $region26: #{tpu_custom_call.1} parent=1 // pred_check
      _
    $region27: #{tpu_custom_call.1} parent=1 // pred_check_branch
      %153 = sbr.rel (0) target = $region29
    $region28: #{tpu_custom_call.1} parent=1 // pred_region
      %154 = dma.done [#allocation4], 256
    $region29: #{tpu_custom_call.1} parent=1 // pred_fallthru
      _
    %155 = vsyncpa [#allocation3], 1
    %156 = vsyncpa [#allocation6], 1
    %157 = vsyncpa [#allocation4], 1

// kernel: tpu_custom_call.1
$region0: #{tpu_custom_call.1}
  #allocation0 [shape = 'u32[]', space=smem, size = 0x4, offset = 0x4, fixed_abs, tag = 'smem constant byte address 0x4 - core index']
  #allocation1 [shape = 'u32[144,128]{1,0:T(1,128)}', space=vmem, size = 0x12000, scoped, tag = 'internal scratch']
  %s0 = inlined_call_operand.hbm [shape: f32[16,32], index: 0, kind: input, shape index: {}]
  %s1 = inlined_call_operand.hbm [shape: f32[32,128], index: 1, kind: input, shape index: {}]
  %s2 = inlined_call_operand.vmem [shape: f32[1,128], index: 2, kind: input, shape index: {}]
  %s3 = inlined_call_operand.hbm [shape: f32[16,128], index: 3, kind: output, shape index: {}]
  %s4 = sld [smem:[#allocation0]]
  $region30: #{tpu_custom_call.1} parent=0
    _
  %s6 = ssub.s32 1, %s4
  %s7 = scalar_select 0, %s6, %s4
  $region1: #{tpu_custom_call.1} parent=0
    #allocation2 [shape = 'u8[8192]{0}', space=vmem, size = 0x2000, scoped, tag = 'input window, operand 0, single buffered']
    #allocation3 [shape = 's32[1]{0}', space=sflag, size = 0x4, scoped, tag = 'scoped memory for tpu_custom_call.1']
    #allocation4 [shape = 's32[1]{0}', space=sflag, size = 0x4, scoped, tag = 'scoped memory for tpu_custom_call.1']
    #allocation5 [shape = 'u8[16384]{0}', space=vmem, size = 0x4000, scoped, tag = 'input window, operand 1, single buffered']
    #allocation6 [shape = 's32[1]{0}', space=sflag, size = 0x4, scoped, tag = 'scoped memory for tpu_custom_call.1']
    #allocation7 [shape = 'u8[8192]{0}', space=vmem, size = 0x2000, scoped, tag = 'output window, operand 0, single buffered']
    %8 = vsyncpa [#allocation3], 0
    %9 = vsyncpa [#allocation6], 0
    %10 = vsyncpa [#allocation4], 0
    // Predicated region
    $region2: #{tpu_custom_call.1} parent=1 // pred_check
      _
    $region3: #{tpu_custom_call.1} parent=1 // pred_check_branch
      %12 = sbr.rel (0) target = $region5
    $region4: #{tpu_custom_call.1} parent=1 // pred_region
      %s14 = ssub.s32 256, 256
      %15 = vsyncadd [#allocation3], %s14
      %s16 = sshll.u32 [#allocation2], 4
      %s17 = int_to_ptr.vmem [resolvable:$true] %s16
      %22 = dma.hbm_to_vmem [thread:$0]  %s0, 256, %s17, [#allocation3], 128, 128, 8
    $region5: #{tpu_custom_call.1} parent=1 // pred_fallthru
      _
    // Predicated region
    $region6: #{tpu_custom_call.1} parent=1 // pred_check
      _
    $region7: #{tpu_custom_call.1} parent=1 // pred_check_branch
      %24 = sbr.rel (0) target = $region9
    $region8: #{tpu_custom_call.1} parent=1 // pred_region
      %s26 = ssub.s32 512, 512
      %27 = vsyncadd [#allocation6], %s26
      %s28 = sshll.u32 [#allocation5], 4
      %s29 = int_to_ptr.vmem [resolvable:$true] %s28
      %34 = dma.hbm_to_vmem [thread:$0]  %s1, 512, %s29, [#allocation6], 128, 128, 8
    $region9: #{tpu_custom_call.1} parent=1 // pred_fallthru
      _
    // Predicated region
    $region10: #{tpu_custom_call.1} parent=1 // pred_check
      _
    $region11: #{tpu_custom_call.1} parent=1 // pred_check_branch
      %36 = sbr.rel (0) target = $region13
    $region12: #{tpu_custom_call.1} parent=1 // pred_region
      _
    $region13: #{tpu_custom_call.1} parent=1 // pred_fallthru
      _
    // Predicated region
    $region14: #{tpu_custom_call.1} parent=1 // pred_check
      _
    $region15: #{tpu_custom_call.1} parent=1 // pred_check_branch
      %38 = sbr.rel (0) target = $region17
    $region16: #{tpu_custom_call.1} parent=1 // pred_region
      %39 = dma.done [#allocation3], 256
    $region17: #{tpu_custom_call.1} parent=1 // pred_fallthru
      _
    // Predicated region
    $region18: #{tpu_custom_call.1} parent=1 // pred_check
      _
    $region19: #{tpu_custom_call.1} parent=1 // pred_check_branch
      %41 = sbr.rel (0) target = $region21
    $region20: #{tpu_custom_call.1} parent=1 // pred_region
      %42 = dma.done [#allocation6], 512
    $region21: #{tpu_custom_call.1} parent=1 // pred_fallthru
      _
    %v43 = vld [vmem:[#allocation2] sm:$0xff]
    %v44 = vld [vmem:[#allocation2 + $0x8] sm:$0xff]
    %v45 = vld [vmem:[#allocation5] sm:$0xff]
    %v46 = vld [vmem:[#allocation5 + $0x8] sm:$0xff]
    %v47 = vld [vmem:[#allocation5 + $0x10] sm:$0xff]
    %v48 = vld [vmem:[#allocation5 + $0x18] sm:$0xff]
    %v49 = vld [vmem:[%s2] sm:$0x1]
    %v51 = vlaneseq
    %v52 = vshrl.u32 %v51, 7
    %v53 = vsub.s32 0, %v52
    %v54 = vrot.slane %v49, %v53
    %vm56 = vcmask 261120
    %v58 = vsel %vm56, %v43, 0
    %v61 = vsel %vm56, %v44, 0
    %63 = vmatprep.subr.mxu0 0.0
    %64 = vmatpush1.msra.mxu0 %v45
    %65 = vmatprep.subr.mxu0 0.0
    %66 = vmatpush1.msra.mxu0 %v46
    %67 = vmatprep.subr.mxu0 0.0
    %68 = vmatpush1.msra.mxu0 %v47
    %69 = vmatprep.subr.mxu0 0.0
    %70 = vmatpush1.msra.mxu0 %v48
    %71 = vmatprep.subr.mxu0 0.0
    %72 = vmatpush1.msra.mxu0 0.0
    %73 = vmatprep.subr.mxu0 0.0
    %74 = vmatpush1.msra.mxu0 0.0
    %75 = vmatprep.subr.mxu0 0.0
    %76 = vmatpush1.msra.mxu0 0.0
    %77 = vmatprep.subr.mxu0 0.0
    %78 = vmatpush1.msra.mxu0 0.0
    %79 = vmatprep.subr.mxu0 0.0
    %80 = vmatpush1.msra.mxu0 0.0
    %81 = vmatprep.subr.mxu0 0.0
    %82 = vmatpush1.msra.mxu0 0.0
    %83 = vmatprep.subr.mxu0 0.0
    %84 = vmatpush1.msra.mxu0 0.0
    %85 = vmatprep.subr.mxu0 0.0
    %86 = vmatpush1.msra.mxu0 0.0
    %87 = vmatprep.subr.mxu0 0.0
    %88 = vmatpush1.msra.mxu0 0.0
    %89 = vmatprep.subr.mxu0 0.0
    %90 = vmatpush1.msra.mxu0 0.0
    %91 = vmatprep.subr.mxu0 0.0
    %92 = vmatpush1.msra.mxu0 0.0
    %93 = vmatprep.subr.mxu0 0.0
    %94 = vmatpush1.msra.mxu0 0.0
    %95 = vmatprep.subr.mxu0 0.0
    %96 = vmatpush1.msra.mxu0 0.0
    %97 = vmatprep.subr.mxu0 0.0
    %98 = vmatpush1.msra.mxu0 0.0
    %99 = vmatprep.subr.mxu0 0.0
    %100 = vmatpush1.msra.mxu0 0.0
    %101 = vmatprep.subr.mxu0 0.0
    %102 = vmatpush1.msra.mxu0 0.0
    %103 = vmatprep.subr.mxu0 0.0
    %104 = vmatpush1.msra.mxu0 0.0
    %105 = vmatprep.subr.mxu0 0.0
    %106 = vmatpush1.msra.mxu0 0.0
    %107 = vmatprep.subr.mxu0 0.0
    %108 = vmatpush1.msra.mxu0 0.0
    %109 = vmatprep.subr.mxu0 0.0
    %110 = vmatpush1.msra.mxu0 0.0
    %111 = vmatprep.subr.mxu0 0.0
    %112 = vmatpush1.msra.mxu0 0.0
    %113 = vmatprep.subr.mxu0 0.0
    %114 = vmatpush1.msra.mxu0 0.0
    %115 = vmatprep.subr.mxu0 0.0
    %116 = vmatpush1.msra.mxu0 0.0
    %117 = vmatprep.subr.mxu0 0.0
    %118 = vmatpush1.msra.mxu0 0.0
    %119 = vmatprep.subr.mxu0 0.0
    %120 = vmatpush1.msra.mxu0 0.0
    %121 = vmatprep.subr.mxu0 0.0
    %122 = vmatpush1.msra.mxu0 0.0
    %123 = vmatprep.subr.mxu0 0.0
    %124 = vmatpush1.msra.mxu0 0.0
    %125 = vmatprep.subr.mxu0 0.0
    %126 = vmatpush1.msra.mxu0 0.0
    %127 = vmatprep.mubr.f32.mxu0 0.0
    %128 = vmatmul.mubr.f32.gmra.mrb[0].mxu0 %v58
    %v129 = vpop.f32.mrb[0].mxu0
    %v130 = vadd.f32 %v54, %v129
    %v131 = vpop.f32.mrb[0].mxu0
    %132 = vmatprep.mubr.f32.mxu0 0.0
    %133 = vmatmul.mubr.f32.gmra.mrb[0].mxu0 %v61
    %v134 = vpop.f32.mrb[0].mxu0
    %v135 = vadd.f32 %v54, %v134
    %v136 = vpop.f32.mrb[0].mxu0
    %137 = vdwg.mxu0
    %138 = vst [vmem:[#allocation7] sm:$0xff] %v130
    %139 = vst [vmem:[#allocation7 + $0x8] sm:$0xff] %v135
    // Predicated region
    $region22: #{tpu_custom_call.1} parent=1 // pred_check
      _
    $region23: #{tpu_custom_call.1} parent=1 // pred_check_branch
      %141 = sbr.rel (0) target = $region25
    $region24: #{tpu_custom_call.1} parent=1 // pred_region
      %s143 = ssub.s32 256, 256
      %144 = vsyncadd [#allocation4], %s143
      %s145 = sshll.u32 [#allocation7], 4
      %s146 = int_to_ptr.vmem [resolvable:$true] %s145
      %151 = dma.vmem_to_hbm [thread:$0]  %s146, 256, %s3, [#allocation4], 128, 128, 8
    $region25: #{tpu_custom_call.1} parent=1 // pred_fallthru
      _
    // Predicated region
    $region26: #{tpu_custom_call.1} parent=1 // pred_check
      _
    $region27: #{tpu_custom_call.1} parent=1 // pred_check_branch
      %153 = sbr.rel (0) target = $region29
    $region28: #{tpu_custom_call.1} parent=1 // pred_region
      %154 = dma.done [#allocation4], 256
    $region29: #{tpu_custom_call.1} parent=1 // pred_fallthru
      _
    %155 = vsyncpa [#allocation3], 1
    %156 = vsyncpa [#allocation6], 1
    %157 = vsyncpa [#allocation4], 1

</llo_original>
